<compile_context>
chip_gen: v7x
topology: tpu7x:2x2x1
jax: 0.10.0
libtpu: 0.0.40
codegen_flags: <defaults>
</compile_context>

<pallas_src>
import functools

import jax
import jax.numpy as jnp
from jax.experimental import pallas as pl
from jax.experimental.pallas import tpu as pltpu

HIDDEN = 300          # logical hidden width of the torch module
H_PAD = 384           # padded hidden width (multiple of 128 lanes, >= 300)
LANE = 128


def _round_up(n, m):
    return ((n + m - 1) // m) * m


def _pad_to(a, shape):
    return jnp.pad(a, [(0, s - d) for d, s in zip(a.shape, shape)])


def _mlp_kernel(x_ref, w1_ref, b1_ref, w2_ref, b2_ref, w3_ref, b3_ref, o_ref):
    # Whole 3-layer MLP runs in one VMEM-resident body; weights are constant
    # across the batch grid (constant index maps), only x/o stream per tile.
    x = x_ref[...]                                            # bf16 (bb, inp)

    # Layer 1: Linear + ReLU  (bf16 operands, f32 accumulate, f32 elementwise)
    h1 = jnp.dot(x, w1_ref[...], preferred_element_type=jnp.float32) + b1_ref[...]
    h1 = jnp.maximum(h1, 0.0)

    # Layer 2: Linear + ReLU
    h2 = jnp.dot(h1.astype(jnp.bfloat16), w2_ref[...],
                 preferred_element_type=jnp.float32) + b2_ref[...]
    h2 = jnp.maximum(h2, 0.0)

    # Layer 3: Linear + Sigmoid (exp and approx reciprocal both land on the EUP)
    h3 = jnp.dot(h2.astype(jnp.bfloat16), w3_ref[...],
                 preferred_element_type=jnp.float32) + b3_ref[...]
    o_ref[...] = pl.reciprocal(1.0 + jnp.exp(-h3), approx=True)


@functools.partial(jax.jit, static_argnames=("block_b",))
def discriminator_forward(x, params, block_b=256):
    """x: (B, inp) float32. params: dict of w1,b1,w2,b2,w3,b3 (unpadded, f32)."""
    B, inp = x.shape
    out = params["w3"].shape[1]
    out_pad = _round_up(max(out, LANE), LANE)      # lane-dense output slab

    # Zero-pad weights/biases once (zeros are exact: padded h columns are 0 after
    # ReLU and hit zero rows of the next weight) and cast matmul operands to bf16.
    # NOTE: for very large `inp` (> ~40K features) w1 should instead be K-tiled
    # with an f32 accumulator to stay inside v7x's 64 MiB VMEM.
    w1 = _pad_to(params["w1"], (inp, H_PAD)).astype(jnp.bfloat16)
    b1 = _pad_to(params["b1"], (1, H_PAD))
    w2 = _pad_to(params["w2"], (H_PAD, H_PAD)).astype(jnp.bfloat16)
    b2 = _pad_to(params["b2"], (1, H_PAD))
    w3 = _pad_to(params["w3"], (H_PAD, out_pad)).astype(jnp.bfloat16)
    b3 = _pad_to(params["b3"], (1, out_pad))

    # Batch tile: big enough to feed the MXU rows, multiple of 8 sublanes, and
    # never larger than the (sublane-rounded) batch itself.
    bb = min(block_b, _round_up(B, 8))
    b_pad = _round_up(B, bb)
    xp = _pad_to(x, (b_pad, inp)).astype(jnp.bfloat16)

    grid = (b_pad // bb,)
    full = lambda shape: pl.BlockSpec(shape, lambda i: (0,) * len(shape))

    flops = 2 * b_pad * (inp * H_PAD + H_PAD * H_PAD + H_PAD * out_pad)
    bytes_accessed = (
        xp.size * 2
        + (w1.size + w2.size + w3.size) * 2
        + (b1.size + b2.size + b3.size) * 4
        + b_pad * out_pad * 4
    )

    y = pl.pallas_call(
        _mlp_kernel,
        out_shape=jax.ShapeDtypeStruct((b_pad, out_pad), jnp.float32),
        grid=grid,
        in_specs=[
            pl.BlockSpec((bb, inp), lambda i: (i, 0)),   # x streams over batch
            full((inp, H_PAD)),                          # w1 (constant per step)
            full((1, H_PAD)),                            # b1
            full((H_PAD, H_PAD)),                        # w2
            full((1, H_PAD)),                            # b2
            full((H_PAD, out_pad)),                      # w3
            full((1, out_pad)),                          # b3
        ],
        out_specs=pl.BlockSpec((bb, out_pad), lambda i: (i, 0)),
        compiler_params=pltpu.CompilerParams(
            dimension_semantics=("parallel",),           # shards batch tiles across TCs
        ),
        cost_estimate=pl.CostEstimate(
            flops=flops,
            transcendentals=b_pad * out_pad,
            bytes_accessed=bytes_accessed,
        ),
    )(xp, w1, b1, w2, b2, w3, b3)

    return y[:B, :out]


def init_params(key, inp, out):
    """Deterministic synthetic init (shapes match nn.Linear in the module)."""
    ks = jax.random.split(key, 6)

    def lin(kw, kb, fan_in, fan_out):
        bound = 1.0 / jnp.sqrt(fan_in)
        w = jax.random.uniform(kw, (fan_in, fan_out), jnp.float32, -bound, bound)
        b = jax.random.uniform(kb, (1, fan_out), jnp.float32, -bound, bound)
        return w, b

    w1, b1 = lin(ks[0], ks[1], inp, HIDDEN)
    w2, b2 = lin(ks[2], ks[3], HIDDEN, HIDDEN)
    w3, b3 = lin(ks[4], ks[5], HIDDEN, out)
    return {"w1": w1, "b1": b1, "w2": w2, "b2": b2, "w3": w3, "b3": b3}


def reference_forward(x, p):
    """Pure-JAX reference with matching bf16-operand / f32-accumulate precision."""
    def lin(h, w, b):
        return jnp.dot(h.astype(jnp.bfloat16), w.astype(jnp.bfloat16),
                       preferred_element_type=jnp.float32) + b
    h = jnp.maximum(lin(x, p["w1"], p["b1"]), 0.0)
    h = jnp.maximum(lin(h, p["w2"], p["b2"]), 0.0)
    return jax.nn.sigmoid(lin(h, p["w3"], p["b3"]))


if __name__ == "__main__":
    key = jax.random.PRNGKey(0)
    k_x, k_p = jax.random.split(key)

    B, INP, OUT = 16, 32, 4
    x = jax.random.normal(k_x, (B, INP), jnp.float32)
    params = init_params(k_p, INP, OUT)

    y = jax.block_until_ready(discriminator_forward(x, params))
    y_ref = reference_forward(x, params)

    assert y.shape == (B, OUT)
    assert bool(jnp.all(jnp.isfinite(y))), "non-finite output"
    assert jnp.allclose(y, y_ref, atol=5e-3, rtol=5e-3), "mismatch vs reference"

    print("KERNEL_OK")
</pallas_src>

<mosaic_0001>
module attributes {stable_mosaic.version = 11 : i64} {
  func.func @_mlp_kernel(%arg0: i32, %arg1: memref<16x32xbf16, #tpu.memory_space<vmem>>, %arg2: memref<32x384xbf16, #tpu.memory_space<vmem>>, %arg3: memref<1x384xf32, #tpu.memory_space<vmem>>, %arg4: memref<384x384xbf16, #tpu.memory_space<vmem>>, %arg5: memref<1x384xf32, #tpu.memory_space<vmem>>, %arg6: memref<384x128xbf16, #tpu.memory_space<vmem>>, %arg7: memref<1x128xf32, #tpu.memory_space<vmem>>, %arg8: memref<16x128xf32, #tpu.memory_space<vmem>>) attributes {dimension_semantics = [#tpu.dimension_semantics<parallel>], iteration_bounds = array<i64: 1>, scalar_prefetch = 0 : i64, scratch_operands = 0 : i64, tpu.core_type = #tpu.core_type<tc>, window_params = [{transform_indices = @transform_0, window_bounds = array<i64: 16, 32>}, {pipeline_mode = #tpu.pipeline_mode<synchronous>, transform_indices = @transform_1, window_bounds = array<i64: 32, 384>}, {pipeline_mode = #tpu.pipeline_mode<synchronous>, transform_indices = @transform_2, window_bounds = array<i64: 1, 384>}, {pipeline_mode = #tpu.pipeline_mode<synchronous>, transform_indices = @transform_3, window_bounds = array<i64: 384, 384>}, {pipeline_mode = #tpu.pipeline_mode<synchronous>, transform_indices = @transform_4, window_bounds = array<i64: 1, 384>}, {pipeline_mode = #tpu.pipeline_mode<synchronous>, transform_indices = @transform_5, window_bounds = array<i64: 384, 128>}, {pipeline_mode = #tpu.pipeline_mode<synchronous>, transform_indices = @transform_6, window_bounds = array<i64: 1, 128>}, {transform_indices = @transform_7, window_bounds = array<i64: 16, 128>}]} {
    %c0 = arith.constant 0 : index
    %c0_0 = arith.constant 0 : index
    %0 = vector.load %arg1[%c0, %c0_0] : memref<16x32xbf16, #tpu.memory_space<vmem>>, vector<16x32xbf16>
    %c0_1 = arith.constant 0 : index
    %c0_2 = arith.constant 0 : index
    %1 = vector.load %arg2[%c0_1, %c0_2] : memref<32x384xbf16, #tpu.memory_space<vmem>>, vector<32x384xbf16>
    %cst = arith.constant dense<0.000000e+00> : vector<16x384xf32>
    %2 = tpu.matmul %0, %1, %cst {dimension_numbers = #tpu.dot_dimension_numbers<[1], [0], [0], [1], [0, 0, 1, 1], [], []>} : vector<16x32xbf16>, vector<32x384xbf16>, vector<16x384xf32> -> vector<16x384xf32>
    %c0_3 = arith.constant 0 : index
    %c0_4 = arith.constant 0 : index
    %3 = vector.load %arg3[%c0_3, %c0_4] : memref<1x384xf32, #tpu.memory_space<vmem>>, vector<1x384xf32>
    %4 = vector.broadcast %3 : vector<1x384xf32> to vector<16x384xf32>
    %5 = arith.addf %2, %4 : vector<16x384xf32>
    %cst_5 = arith.constant 0.000000e+00 : f32
    %6 = vector.broadcast %cst_5 : f32 to vector<16x384xf32>
    %7 = arith.maximumf %5, %6 : vector<16x384xf32>
    %8 = arith.truncf %7 : vector<16x384xf32> to vector<16x384xbf16>
    %c0_6 = arith.constant 0 : index
    %c0_7 = arith.constant 0 : index
    %9 = vector.load %arg4[%c0_6, %c0_7] : memref<384x384xbf16, #tpu.memory_space<vmem>>, vector<384x384xbf16>
    %cst_8 = arith.constant dense<0.000000e+00> : vector<16x384xf32>
    %10 = tpu.matmul %8, %9, %cst_8 {dimension_numbers = #tpu.dot_dimension_numbers<[1], [0], [0], [1], [0, 0, 1, 1], [], []>} : vector<16x384xbf16>, vector<384x384xbf16>, vector<16x384xf32> -> vector<16x384xf32>
    %c0_9 = arith.constant 0 : index
    %c0_10 = arith.constant 0 : index
    %11 = vector.load %arg5[%c0_9, %c0_10] : memref<1x384xf32, #tpu.memory_space<vmem>>, vector<1x384xf32>
    %12 = vector.broadcast %11 : vector<1x384xf32> to vector<16x384xf32>
    %13 = arith.addf %10, %12 : vector<16x384xf32>
    %cst_11 = arith.constant 0.000000e+00 : f32
    %14 = vector.broadcast %cst_11 : f32 to vector<16x384xf32>
    %15 = arith.maximumf %13, %14 : vector<16x384xf32>
    %16 = arith.truncf %15 : vector<16x384xf32> to vector<16x384xbf16>
    %c0_12 = arith.constant 0 : index
    %c0_13 = arith.constant 0 : index
    %17 = vector.load %arg6[%c0_12, %c0_13] : memref<384x128xbf16, #tpu.memory_space<vmem>>, vector<384x128xbf16>
    %cst_14 = arith.constant dense<0.000000e+00> : vector<16x128xf32>
    %18 = tpu.matmul %16, %17, %cst_14 {dimension_numbers = #tpu.dot_dimension_numbers<[1], [0], [0], [1], [0, 0, 1, 1], [], []>} : vector<16x384xbf16>, vector<384x128xbf16>, vector<16x128xf32> -> vector<16x128xf32>
    %c0_15 = arith.constant 0 : index
    %c0_16 = arith.constant 0 : index
    %19 = vector.load %arg7[%c0_15, %c0_16] : memref<1x128xf32, #tpu.memory_space<vmem>>, vector<1x128xf32>
    %20 = vector.broadcast %19 : vector<1x128xf32> to vector<16x128xf32>
    %21 = arith.addf %18, %20 : vector<16x128xf32>
    %cst_17 = arith.constant 0.000000e+00 : f32
    %22 = vector.broadcast %cst_17 : f32 to vector<16x128xf32>
    %23 = arith.subf %22, %21 : vector<16x128xf32>
    %24 = math.exp %23 : vector<16x128xf32>
    %cst_18 = arith.constant 1.000000e+00 : f32
    %25 = vector.broadcast %cst_18 : f32 to vector<16x128xf32>
    %26 = arith.addf %25, %24 : vector<16x128xf32>
    %27 = tpu.reciprocal %26 {approx = true} : vector<16x128xf32> -> vector<16x128xf32>
    %c0_19 = arith.constant 0 : index
    %c0_20 = arith.constant 0 : index
    %28 = vector.load %arg8[%c0_19, %c0_20] : memref<16x128xf32, #tpu.memory_space<vmem>>, vector<16x128xf32>
    tpu.vector_store %arg8[%c0_19, %c0_20], %27 {strides = array<i32>} : memref<16x128xf32, #tpu.memory_space<vmem>>, vector<16x128xf32>,
    return
  }
  func.func @transform_0(%arg0: i32) -> (i32, i32) {
    %c0_i32 = arith.constant 0 : i32
    %c0_i32_0 = arith.constant 0 : i32
    return %arg0, %c0_i32 : i32, i32
  }
  func.func @transform_1(%arg0: i32) -> (i32, i32) {
    %c0_i32 = arith.constant 0 : i32
    %c0_i32_0 = arith.constant 0 : i32
    %c0_i32_1 = arith.constant 0 : i32
    return %c0_i32, %c0_i32_0 : i32, i32
  }
  func.func @transform_2(%arg0: i32) -> (i32, i32) {
    %c0_i32 = arith.constant 0 : i32
    %c0_i32_0 = arith.constant 0 : i32
    %c0_i32_1 = arith.constant 0 : i32
    return %c0_i32, %c0_i32_0 : i32, i32
  }
  func.func @transform_3(%arg0: i32) -> (i32, i32) {
    %c0_i32 = arith.constant 0 : i32
    %c0_i32_0 = arith.constant 0 : i32
    %c0_i32_1 = arith.constant 0 : i32
    return %c0_i32, %c0_i32_0 : i32, i32
  }
  func.func @transform_4(%arg0: i32) -> (i32, i32) {
    %c0_i32 = arith.constant 0 : i32
    %c0_i32_0 = arith.constant 0 : i32
    %c0_i32_1 = arith.constant 0 : i32
    return %c0_i32, %c0_i32_0 : i32, i32
  }
  func.func @transform_5(%arg0: i32) -> (i32, i32) {
    %c0_i32 = arith.constant 0 : i32
    %c0_i32_0 = arith.constant 0 : i32
    %c0_i32_1 = arith.constant 0 : i32
    return %c0_i32, %c0_i32_0 : i32, i32
  }
  func.func @transform_6(%arg0: i32) -> (i32, i32) {
    %c0_i32 = arith.constant 0 : i32
    %c0_i32_0 = arith.constant 0 : i32
    %c0_i32_1 = arith.constant 0 : i32
    return %c0_i32, %c0_i32_0 : i32, i32
  }
  func.func @transform_7(%arg0: i32) -> (i32, i32) {
    %c0_i32 = arith.constant 0 : i32
    %c0_i32_0 = arith.constant 0 : i32
    return %arg0, %c0_i32 : i32, i32
  }
}

</mosaic_0001>

<llo_original>
// kernel: discriminator_forward.1
$region0: #{discriminator_forward.1}
  #allocation0 [shape = 'u32[]', space=smem, size = 0x4, offset = 0x4, fixed_abs, tag = 'smem constant byte address 0x4 - core index']
  #allocation1 [shape = 'u32[144,128]{1,0:T(1,128)}', space=vmem, size = 0x12000, scoped, tag = 'internal scratch']
  %s0 = inlined_call_operand.vmem [shape: bf16[16,32], index: 0, kind: input, shape index: {}]
  %s1 = inlined_call_operand.vmem [shape: bf16[32,384], index: 1, kind: input, shape index: {}]
  %s2 = inlined_call_operand.vmem [shape: f32[1,384], index: 2, kind: input, shape index: {}]
  %s3 = inlined_call_operand.vmem [shape: bf16[384,384], index: 3, kind: input, shape index: {}]
  %s4 = inlined_call_operand.vmem [shape: f32[1,384], index: 4, kind: input, shape index: {}]
  %s5 = inlined_call_operand.vmem [shape: bf16[384,128], index: 5, kind: input, shape index: {}]
  %s6 = inlined_call_operand.vmem [shape: f32[1,128], index: 6, kind: input, shape index: {}]
  %s7 = inlined_call_operand.vmem [shape: f32[16,128], index: 7, kind: output, shape index: {}]
  %s8 = sld [smem:[#allocation0]]
  $region38: #{discriminator_forward.1} parent=0
    _
  %s10 = ssub.s32 1, %s8
  %s11 = scalar_select 0, %s10, %s8
  // Predicated region
  $region2: #{discriminator_forward.1} parent=0 // pred_check
    _
  $region3: #{discriminator_forward.1} parent=0 // pred_check_branch
    %13 = sbr.rel (0) target = $region5
  $region4: #{discriminator_forward.1} parent=0 // pred_region
    _
  $region5: #{discriminator_forward.1} parent=0 // pred_fallthru
    _
  // Predicated region
  $region6: #{discriminator_forward.1} parent=0 // pred_check
    _
  $region7: #{discriminator_forward.1} parent=0 // pred_check_branch
    %15 = sbr.rel (0) target = $region9
  $region8: #{discriminator_forward.1} parent=0 // pred_region
    _
  $region9: #{discriminator_forward.1} parent=0 // pred_fallthru
    _
  // Predicated region
  $region10: #{discriminator_forward.1} parent=0 // pred_check
    _
  $region11: #{discriminator_forward.1} parent=0 // pred_check_branch
    %17 = sbr.rel (0) target = $region13
  $region12: #{discriminator_forward.1} parent=0 // pred_region
    _
  $region13: #{discriminator_forward.1} parent=0 // pred_fallthru
    _
  // Predicated region
  $region14: #{discriminator_forward.1} parent=0 // pred_check
    _
  $region15: #{discriminator_forward.1} parent=0 // pred_check_branch
    %19 = sbr.rel (0) target = $region17
  $region16: #{discriminator_forward.1} parent=0 // pred_region
    _
  $region17: #{discriminator_forward.1} parent=0 // pred_fallthru
    _
  // Predicated region
  $region18: #{discriminator_forward.1} parent=0 // pred_check
    _
  $region19: #{discriminator_forward.1} parent=0 // pred_check_branch
    %21 = sbr.rel (0) target = $region21
  $region20: #{discriminator_forward.1} parent=0 // pred_region
    _
  $region21: #{discriminator_forward.1} parent=0 // pred_fallthru
    _
  // Predicated region
  $region22: #{discriminator_forward.1} parent=0 // pred_check
    _
  $region23: #{discriminator_forward.1} parent=0 // pred_check_branch
    %23 = sbr.rel (0) target = $region25
  $region24: #{discriminator_forward.1} parent=0 // pred_region
    _
  $region25: #{discriminator_forward.1} parent=0 // pred_fallthru
    _
  // Predicated region
  $region26: #{discriminator_forward.1} parent=0 // pred_check
    _
  $region27: #{discriminator_forward.1} parent=0 // pred_check_branch
    %25 = sbr.rel (0) target = $region29
  $region28: #{discriminator_forward.1} parent=0 // pred_region
    _
  $region29: #{discriminator_forward.1} parent=0 // pred_fallthru
    _
  %v27 = vld [vmem:[%s0] sm:$0xf]
  %v28 = vld [vmem:[%s0 + $0x4] sm:$0xf]
  %v29 = vld [vmem:[%s1] sm:$0xff]
  %v30 = vld [vmem:[%s1 + $0x8] sm:$0xf]
  %v31 = vld [vmem:[%s1 + $0xc] sm:$0xff]
  %v32 = vld [vmem:[%s1 + $0x14] sm:$0xf]
  %v33 = vld [vmem:[%s1 + $0x18] sm:$0xff]
  %v34 = vld [vmem:[%s1 + $0x20] sm:$0xf]
  %v35 = vld [vmem:[%s1 + $0x24] sm:$0xff]
  %v36 = vld [vmem:[%s1 + $0x2c] sm:$0xf]
  %v37 = vld [vmem:[%s2] sm:$0x7]
  %v39 = vlaneseq
  %v40 = vshrl.u32 %v39, 7
  %v41 = vsub.s32 0, %v40
  %v42 = vrot.slane %v37, %v41
  %v43 = vlaneseq
  %v44 = vshrl.u32 %v43, 7
  %v45 = vsub.s32 1, %v44
  %v46 = vrot.slane %v37, %v45
  %v47 = vlaneseq
  %v48 = vshrl.u32 %v47, 7
  %v49 = vsub.s32 2, %v48
  %v50 = vrot.slane %v37, %v49
  %v56 = vunpack.c.l.b16 %v27
  %v57 = vunpack.c.l.b16 %v28
  %v58 = vpack.c.b16 %v57, %v56
  %v67 = vunpack.c.l.b16 %v29
  %v68 = vunpack.c.h.b16 %v29
  %v69 = vunpack.c.l.b16 %v30
  %v70 = vunpack.c.l.b16 %v31
  %v71 = vunpack.c.h.b16 %v31
  %v72 = vunpack.c.l.b16 %v32
  %v73 = vunpack.c.l.b16 %v33
  %v74 = vunpack.c.h.b16 %v33
  %v75 = vunpack.c.l.b16 %v34
  %v76 = vunpack.c.l.b16 %v35
  %v77 = vunpack.c.h.b16 %v35
  %v78 = vunpack.c.l.b16 %v36
  %v79 = vpack.c.b16 %v70, %v67
  %v80 = vpack.c.b16 %v71, %v68
  %v81 = vpack.c.b16 %v72, %v69
  %v82 = vpack.c.b16 %v76, %v73
  %v83 = vpack.c.b16 %v77, %v74
  %v84 = vpack.c.b16 %v78, %v75
  %vm91 = vcmask 261120
  %v93 = vsel %vm91, %v58, 0
  %95 = vmatprep.subr.bf16.mxu0 %v80
  %96 = vmatpush1.bf16.msra.mxu0 %v79
  %97 = vmatprep.subr.bf16.mxu0 %v83
  %98 = vmatpush1.bf16.msra.mxu0 %v82
  %99 = vmatprep.subr.bf16.mxu0 0
  %100 = vmatpush1.bf16.msra.mxu0 0
  %101 = vmatprep.subr.bf16.mxu0 0
  %102 = vmatpush1.bf16.msra.mxu0 0
  %103 = vmatprep.subr.bf16.mxu0 0
  %104 = vmatpush1.bf16.msra.mxu0 0
  %105 = vmatprep.subr.bf16.mxu0 0
  %106 = vmatpush1.bf16.msra.mxu0 0
  %107 = vmatprep.subr.bf16.mxu0 0
  %108 = vmatpush1.bf16.msra.mxu0 0
  %109 = vmatprep.subr.bf16.mxu0 0
  %110 = vmatpush1.bf16.msra.mxu0 0
  %111 = vmatprep.subr.bf16.mxu0 0
  %112 = vmatpush1.bf16.msra.mxu0 0
  %113 = vmatprep.subr.bf16.mxu0 0
  %114 = vmatpush1.bf16.msra.mxu0 0
  %115 = vmatprep.subr.bf16.mxu0 0
  %116 = vmatpush1.bf16.msra.mxu0 0
  %117 = vmatprep.subr.bf16.mxu0 0
  %118 = vmatpush1.bf16.msra.mxu0 0
  %119 = vmatprep.subr.bf16.mxu0 0
  %120 = vmatpush1.bf16.msra.mxu0 0
  %121 = vmatprep.subr.bf16.mxu0 0
  %122 = vmatpush1.bf16.msra.mxu0 0
  %123 = vmatprep.subr.bf16.mxu0 0
  %124 = vmatpush1.bf16.msra.mxu0 0
  %125 = vmatprep.subr.bf16.mxu0 0
  %126 = vmatpush1.bf16.msra.mxu0 0
  %127 = vmatprep.mubr.bf16.mxu0 0
  %128 = vmatmul.mubr.bf16.gmra.mrb[0].mxu0 %v93
  %v129 = vpop.f32.mrb[0].mxu0
  %v130 = vadd.f32 %v42, %v129
  %v131 = vpop.f32.mrb[0].mxu0
  %v132 = vadd.f32 %v46, %v131
  %v133 = vpop.f32.mrb[0].mxu0
  %v134 = vadd.f32 %v42, %v133
  %v135 = vpop.f32.mrb[0].mxu0
  %v136 = vadd.f32 %v46, %v135
  %137 = vdwg.mxu0
  %138 = vmatprep.subr.bf16.mxu0 0
  %139 = vmatpush1.bf16.msra.mxu0 %v81
  %140 = vmatprep.subr.bf16.mxu0 0
  %141 = vmatpush1.bf16.msra.mxu0 %v84
  %142 = vmatprep.subr.bf16.mxu0 0
  %143 = vmatpush1.bf16.msra.mxu0 0
  %144 = vmatprep.subr.bf16.mxu0 0
  %145 = vmatpush1.bf16.msra.mxu0 0
  %146 = vmatprep.subr.bf16.mxu0 0
  %147 = vmatpush1.bf16.msra.mxu0 0
  %148 = vmatprep.subr.bf16.mxu0 0
  %149 = vmatpush1.bf16.msra.mxu0 0
  %150 = vmatprep.subr.bf16.mxu0 0
  %151 = vmatpush1.bf16.msra.mxu0 0
  %152 = vmatprep.subr.bf16.mxu0 0
  %153 = vmatpush1.bf16.msra.mxu0 0
  %154 = vmatprep.subr.bf16.mxu0 0
  %155 = vmatpush1.bf16.msra.mxu0 0
  %156 = vmatprep.subr.bf16.mxu0 0
  %157 = vmatpush1.bf16.msra.mxu0 0
  %158 = vmatprep.subr.bf16.mxu0 0
  %159 = vmatpush1.bf16.msra.mxu0 0
  %160 = vmatprep.subr.bf16.mxu0 0
  %161 = vmatpush1.bf16.msra.mxu0 0
  %162 = vmatprep.subr.bf16.mxu0 0
  %163 = vmatpush1.bf16.msra.mxu0 0
  %164 = vmatprep.subr.bf16.mxu0 0
  %165 = vmatpush1.bf16.msra.mxu0 0
  %166 = vmatprep.subr.bf16.mxu0 0
  %167 = vmatpush1.bf16.msra.mxu0 0
  %168 = vmatprep.subr.bf16.mxu0 0
  %169 = vmatpush1.bf16.msra.mxu0 0
  %170 = vmatprep.mubr.bf16.mxu0 0
  %171 = vmatmul.mubr.bf16.gmra.mrb[0].mxu0 %v93
  %v172 = vpop.f32.mrb[0].mxu0
  %v173 = vadd.f32 %v50, %v172
  %v174 = vpop.f32.mrb[0].mxu0
  %v175 = vpop.f32.mrb[0].mxu0
  %v176 = vadd.f32 %v50, %v175
  %v177 = vpop.f32.mrb[0].mxu0
  %178 = vdwg.mxu0
  %v179 = vmax.f32 %v130, 0.0
  %v180 = vmax.f32 %v132, 0.0
  %v181 = vmax.f32 %v173, 0.0
  %v182 = vmax.f32 %v134, 0.0
  %v183 = vmax.f32 %v136, 0.0
  %v184 = vmax.f32 %v176, 0.0
  %v185 = vpack.c.bf16 %v182, %v179
  %v186 = vpack.c.bf16 %v183, %v180
  %v187 = vpack.c.bf16 %v184, %v181
  %v188 = vld [vmem:[%s3] sm:$0xff]
  %v189 = vld [vmem:[%s3 + $0x8] sm:$0xf]
  %v190 = vld [vmem:[%s3 + $0xc] sm:$0xff]
  %v191 = vld [vmem:[%s3 + $0x14] sm:$0xf]
  %v192 = vld [vmem:[%s3 + $0x18] sm:$0xff]
  %v193 = vld [vmem:[%s3 + $0x20] sm:$0xf]
  %v194 = vld [vmem:[%s3 + $0x24] sm:$0xff]
  %v195 = vld [vmem:[%s3 + $0x2c] sm:$0xf]
  %v196 = vld [vmem:[%s3 + $0x30] sm:$0xff]
  %v197 = vld [vmem:[%s3 + $0x38] sm:$0xf]
  %v198 = vld [vmem:[%s3 + $0x3c] sm:$0xff]
  %v199 = vld [vmem:[%s3 + $0x44] sm:$0xf]
  %v200 = vld [vmem:[%s3 + $0x48] sm:$0xff]
  %v201 = vld [vmem:[%s3 + $0x50] sm:$0xf]
  %v202 = vld [vmem:[%s3 + $0x54] sm:$0xff]
  %v203 = vld [vmem:[%s3 + $0x5c] sm:$0xf]
  %v204 = vld [vmem:[%s3 + $0x60] sm:$0xff]
  %v205 = vld [vmem:[%s3 + $0x68] sm:$0xf]
  %v206 = vld [vmem:[%s3 + $0x6c] sm:$0xff]
  %v207 = vld [vmem:[%s3 + $0x74] sm:$0xf]
  %v208 = vld [vmem:[%s3 + $0x78] sm:$0xff]
  %v209 = vld [vmem:[%s3 + $0x80] sm:$0xf]
  %v210 = vld [vmem:[%s3 + $0x84] sm:$0xff]
  %v211 = vld [vmem:[%s3 + $0x8c] sm:$0xf]
  %v212 = vld [vmem:[%s3 + $0x90] sm:$0xff]
  %v213 = vld [vmem:[%s3 + $0x98] sm:$0xf]
  %v214 = vld [vmem:[%s3 + $0x9c] sm:$0xff]
  %v215 = vld [vmem:[%s3 + $0xa4] sm:$0xf]
  %v216 = vld [vmem:[%s3 + $0xa8] sm:$0xff]
  %v217 = vld [vmem:[%s3 + $0xb0] sm:$0xf]
  %v218 = vld [vmem:[%s3 + $0xb4] sm:$0xff]
  %v219 = vld [vmem:[%s3 + $0xbc] sm:$0xf]
  %v220 = vld [vmem:[%s3 + $0xc0] sm:$0xff]
  %v221 = vld [vmem:[%s3 + $0xc8] sm:$0xf]
  %v222 = vld [vmem:[%s3 + $0xcc] sm:$0xff]
  %v223 = vld [vmem:[%s3 + $0xd4] sm:$0xf]
  %v224 = vld [vmem:[%s3 + $0xd8] sm:$0xff]
  %v225 = vld [vmem:[%s3 + $0xe0] sm:$0xf]
  %v226 = vld [vmem:[%s3 + $0xe4] sm:$0xff]
  %v227 = vld [vmem:[%s3 + $0xec] sm:$0xf]
  %v228 = vld [vmem:[%s3 + $0xf0] sm:$0xff]
  %v229 = vld [vmem:[%s3 + $0xf8] sm:$0xf]
  %v230 = vld [vmem:[%s3 + $0xfc] sm:$0xff]
  %v231 = vld [vmem:[%s3 + $0x104] sm:$0xf]
  %v232 = vld [vmem:[%s3 + $0x108] sm:$0xff]
  %v233 = vld [vmem:[%s3 + $0x110] sm:$0xf]
  %v234 = vld [vmem:[%s3 + $0x114] sm:$0xff]
  %v235 = vld [vmem:[%s3 + $0x11c] sm:$0xf]
  %v236 = vld [vmem:[%s3 + $0x120] sm:$0xff]
  %v237 = vld [vmem:[%s3 + $0x128] sm:$0xf]
  %v238 = vld [vmem:[%s3 + $0x12c] sm:$0xff]
  %v239 = vld [vmem:[%s3 + $0x134] sm:$0xf]
  %v240 = vld [vmem:[%s3 + $0x138] sm:$0xff]
  %v241 = vld [vmem:[%s3 + $0x140] sm:$0xf]
  %v242 = vld [vmem:[%s3 + $0x144] sm:$0xff]
  %v243 = vld [vmem:[%s3 + $0x14c] sm:$0xf]
  %v244 = vld [vmem:[%s3 + $0x150] sm:$0xff]
  %v245 = vld [vmem:[%s3 + $0x158] sm:$0xf]
  %v246 = vld [vmem:[%s3 + $0x15c] sm:$0xff]
  %v247 = vld [vmem:[%s3 + $0x164] sm:$0xf]
  %v248 = vld [vmem:[%s3 + $0x168] sm:$0xff]
  %v249 = vld [vmem:[%s3 + $0x170] sm:$0xf]
  %v250 = vld [vmem:[%s3 + $0x174] sm:$0xff]
  %v251 = vld [vmem:[%s3 + $0x17c] sm:$0xf]
  %v252 = vld [vmem:[%s3 + $0x180] sm:$0xff]
  %v253 = vld [vmem:[%s3 + $0x188] sm:$0xf]
  %v254 = vld [vmem:[%s3 + $0x18c] sm:$0xff]
  %v255 = vld [vmem:[%s3 + $0x194] sm:$0xf]
  %v256 = vld [vmem:[%s3 + $0x198] sm:$0xff]
  %v257 = vld [vmem:[%s3 + $0x1a0] sm:$0xf]
  %v258 = vld [vmem:[%s3 + $0x1a4] sm:$0xff]
  %v259 = vld [vmem:[%s3 + $0x1ac] sm:$0xf]
  %v260 = vld [vmem:[%s3 + $0x1b0] sm:$0xff]
  %v261 = vld [vmem:[%s3 + $0x1b8] sm:$0xf]
  %v262 = vld [vmem:[%s3 + $0x1bc] sm:$0xff]
  %v263 = vld [vmem:[%s3 + $0x1c4] sm:$0xf]
  %v264 = vld [vmem:[%s3 + $0x1c8] sm:$0xff]
  %v265 = vld [vmem:[%s3 + $0x1d0] sm:$0xf]
  %v266 = vld [vmem:[%s3 + $0x1d4] sm:$0xff]
  %v267 = vld [vmem:[%s3 + $0x1dc] sm:$0xf]
  %v268 = vld [vmem:[%s3 + $0x1e0] sm:$0xff]
  %v269 = vld [vmem:[%s3 + $0x1e8] sm:$0xf]
  %v270 = vld [vmem:[%s3 + $0x1ec] sm:$0xff]
  %v271 = vld [vmem:[%s3 + $0x1f4] sm:$0xf]
  %v272 = vld [vmem:[%s3 + $0x1f8] sm:$0xff]
  %v273 = vld [vmem:[%s3 + $0x200] sm:$0xf]
  %v274 = vld [vmem:[%s3 + $0x204] sm:$0xff]
  %v275 = vld [vmem:[%s3 + $0x20c] sm:$0xf]
  %v276 = vld [vmem:[%s3 + $0x210] sm:$0xff]
  %v277 = vld [vmem:[%s3 + $0x218] sm:$0xf]
  %v278 = vld [vmem:[%s3 + $0x21c] sm:$0xff]
  %v279 = vld [vmem:[%s3 + $0x224] sm:$0xf]
  %v280 = vld [vmem:[%s3 + $0x228] sm:$0xff]
  %v281 = vld [vmem:[%s3 + $0x230] sm:$0xf]
  %v282 = vld [vmem:[%s3 + $0x234] sm:$0xff]
  %v283 = vld [vmem:[%s3 + $0x23c] sm:$0xf]
  %v284 = vld [vmem:[%s4] sm:$0x7]
  %v286 = vlaneseq
  %v287 = vshrl.u32 %v286, 7
  %v288 = vsub.s32 0, %v287
  %v289 = vrot.slane %v284, %v288
  %v290 = vlaneseq
  %v291 = vshrl.u32 %v290, 7
  %v292 = vsub.s32 1, %v291
  %v293 = vrot.slane %v284, %v292
  %v294 = vlaneseq
  %v295 = vshrl.u32 %v294, 7
  %v296 = vsub.s32 2, %v295
  %v297 = vrot.slane %v284, %v296
  %v397 = vunpack.c.l.b16 %v188
  %v398 = vunpack.c.h.b16 %v188
  %v399 = vunpack.c.l.b16 %v189
  %v400 = vunpack.c.l.b16 %v190
  %v401 = vunpack.c.h.b16 %v190
  %v402 = vunpack.c.l.b16 %v191
  %v403 = vunpack.c.l.b16 %v192
  %v404 = vunpack.c.h.b16 %v192
  %v405 = vunpack.c.l.b16 %v193
  %v406 = vunpack.c.l.b16 %v194
  %v407 = vunpack.c.h.b16 %v194
  %v408 = vunpack.c.l.b16 %v195
  %v409 = vunpack.c.l.b16 %v196
  %v410 = vunpack.c.h.b16 %v196
  %v411 = vunpack.c.l.b16 %v197
  %v412 = vunpack.c.l.b16 %v198
  %v413 = vunpack.c.h.b16 %v198
  %v414 = vunpack.c.l.b16 %v199
  %v415 = vunpack.c.l.b16 %v200
  %v416 = vunpack.c.h.b16 %v200
  %v417 = vunpack.c.l.b16 %v201
  %v418 = vunpack.c.l.b16 %v202
  %v419 = vunpack.c.h.b16 %v202
  %v420 = vunpack.c.l.b16 %v203
  %v421 = vunpack.c.l.b16 %v204
  %v422 = vunpack.c.h.b16 %v204
  %v423 = vunpack.c.l.b16 %v205
  %v424 = vunpack.c.l.b16 %v206
  %v425 = vunpack.c.h.b16 %v206
  %v426 = vunpack.c.l.b16 %v207
  %v427 = vunpack.c.l.b16 %v208
  %v428 = vunpack.c.h.b16 %v208
  %v429 = vunpack.c.l.b16 %v209
  %v430 = vunpack.c.l.b16 %v210
  %v431 = vunpack.c.h.b16 %v210
  %v432 = vunpack.c.l.b16 %v211
  %v433 = vunpack.c.l.b16 %v212
  %v434 = vunpack.c.h.b16 %v212
  %v435 = vunpack.c.l.b16 %v213
  %v436 = vunpack.c.l.b16 %v214
  %v437 = vunpack.c.h.b16 %v214
  %v438 = vunpack.c.l.b16 %v215
  %v439 = vunpack.c.l.b16 %v216
  %v440 = vunpack.c.h.b16 %v216
  %v441 = vunpack.c.l.b16 %v217
  %v442 = vunpack.c.l.b16 %v218
  %v443 = vunpack.c.h.b16 %v218
  %v444 = vunpack.c.l.b16 %v219
  %v445 = vunpack.c.l.b16 %v220
  %v446 = vunpack.c.h.b16 %v220
  %v447 = vunpack.c.l.b16 %v221
  %v448 = vunpack.c.l.b16 %v222
  %v449 = vunpack.c.h.b16 %v222
  %v450 = vunpack.c.l.b16 %v223
  %v451 = vunpack.c.l.b16 %v224
  %v452 = vunpack.c.h.b16 %v224
  %v453 = vunpack.c.l.b16 %v225
  %v454 = vunpack.c.l.b16 %v226
  %v455 = vunpack.c.h.b16 %v226
  %v456 = vunpack.c.l.b16 %v227
  %v457 = vunpack.c.l.b16 %v228
  %v458 = vunpack.c.h.b16 %v228
  %v459 = vunpack.c.l.b16 %v229
  %v460 = vunpack.c.l.b16 %v230
  %v461 = vunpack.c.h.b16 %v230
  %v462 = vunpack.c.l.b16 %v231
  %v463 = vunpack.c.l.b16 %v232
  %v464 = vunpack.c.h.b16 %v232
  %v465 = vunpack.c.l.b16 %v233
  %v466 = vunpack.c.l.b16 %v234
  %v467 = vunpack.c.h.b16 %v234
  %v468 = vunpack.c.l.b16 %v235
  %v469 = vunpack.c.l.b16 %v236
  %v470 = vunpack.c.h.b16 %v236
  %v471 = vunpack.c.l.b16 %v237
  %v472 = vunpack.c.l.b16 %v238
  %v473 = vunpack.c.h.b16 %v238
  %v474 = vunpack.c.l.b16 %v239
  %v475 = vunpack.c.l.b16 %v240
  %v476 = vunpack.c.h.b16 %v240
  %v477 = vunpack.c.l.b16 %v241
  %v478 = vunpack.c.l.b16 %v242
  %v479 = vunpack.c.h.b16 %v242
  %v480 = vunpack.c.l.b16 %v243
  %v481 = vunpack.c.l.b16 %v244
  %v482 = vunpack.c.h.b16 %v244
  %v483 = vunpack.c.l.b16 %v245
  %v484 = vunpack.c.l.b16 %v246
  %v485 = vunpack.c.h.b16 %v246
  %v486 = vunpack.c.l.b16 %v247
  %v487 = vunpack.c.l.b16 %v248
  %v488 = vunpack.c.h.b16 %v248
  %v489 = vunpack.c.l.b16 %v249
  %v490 = vunpack.c.l.b16 %v250
  %v491 = vunpack.c.h.b16 %v250
  %v492 = vunpack.c.l.b16 %v251
  %v493 = vunpack.c.l.b16 %v252
  %v494 = vunpack.c.h.b16 %v252
  %v495 = vunpack.c.l.b16 %v253
  %v496 = vunpack.c.l.b16 %v254
  %v497 = vunpack.c.h.b16 %v254
  %v498 = vunpack.c.l.b16 %v255
  %v499 = vunpack.c.l.b16 %v256
  %v500 = vunpack.c.h.b16 %v256
  %v501 = vunpack.c.l.b16 %v257
  %v502 = vunpack.c.l.b16 %v258
  %v503 = vunpack.c.h.b16 %v258
  %v504 = vunpack.c.l.b16 %v259
  %v505 = vunpack.c.l.b16 %v260
  %v506 = vunpack.c.h.b16 %v260
  %v507 = vunpack.c.l.b16 %v261
  %v508 = vunpack.c.l.b16 %v262
  %v509 = vunpack.c.h.b16 %v262
  %v510 = vunpack.c.l.b16 %v263
  %v511 = vunpack.c.l.b16 %v264
  %v512 = vunpack.c.h.b16 %v264
  %v513 = vunpack.c.l.b16 %v265
  %v514 = vunpack.c.l.b16 %v266
  %v515 = vunpack.c.h.b16 %v266
  %v516 = vunpack.c.l.b16 %v267
  %v517 = vunpack.c.l.b16 %v268
  %v518 = vunpack.c.h.b16 %v268
  %v519 = vunpack.c.l.b16 %v269
  %v520 = vunpack.c.l.b16 %v270
  %v521 = vunpack.c.h.b16 %v270
  %v522 = vunpack.c.l.b16 %v271
  %v523 = vunpack.c.l.b16 %v272
  %v524 = vunpack.c.h.b16 %v272
  %v525 = vunpack.c.l.b16 %v273
  %v526 = vunpack.c.l.b16 %v274
  %v527 = vunpack.c.h.b16 %v274
  %v528 = vunpack.c.l.b16 %v275
  %v529 = vunpack.c.l.b16 %v276
  %v530 = vunpack.c.h.b16 %v276
  %v531 = vunpack.c.l.b16 %v277
  %v532 = vunpack.c.l.b16 %v278
  %v533 = vunpack.c.h.b16 %v278
  %v534 = vunpack.c.l.b16 %v279
  %v535 = vunpack.c.l.b16 %v280
  %v536 = vunpack.c.h.b16 %v280
  %v537 = vunpack.c.l.b16 %v281
  %v538 = vunpack.c.l.b16 %v282
  %v539 = vunpack.c.h.b16 %v282
  %v540 = vunpack.c.l.b16 %v283
  %v541 = vpack.c.b16 %v400, %v397
  %v542 = vpack.c.b16 %v401, %v398
  %v543 = vpack.c.b16 %v402, %v399
  %v544 = vpack.c.b16 %v406, %v403
  %v545 = vpack.c.b16 %v407, %v404
  %v546 = vpack.c.b16 %v408, %v405
  %v547 = vpack.c.b16 %v412, %v409
  %v548 = vpack.c.b16 %v413, %v410
  %v549 = vpack.c.b16 %v414, %v411
  %v550 = vpack.c.b16 %v418, %v415
  %v551 = vpack.c.b16 %v419, %v416
  %v552 = vpack.c.b16 %v420, %v417
  %v553 = vpack.c.b16 %v424, %v421
  %v554 = vpack.c.b16 %v425, %v422
  %v555 = vpack.c.b16 %v426, %v423
  %v556 = vpack.c.b16 %v430, %v427
  %v557 = vpack.c.b16 %v431, %v428
  %v558 = vpack.c.b16 %v432, %v429
  %v559 = vpack.c.b16 %v436, %v433
  %v560 = vpack.c.b16 %v437, %v434
  %v561 = vpack.c.b16 %v438, %v435
  %v562 = vpack.c.b16 %v442, %v439
  %v563 = vpack.c.b16 %v443, %v440
  %v564 = vpack.c.b16 %v444, %v441
  %v565 = vpack.c.b16 %v448, %v445
  %v566 = vpack.c.b16 %v449, %v446
  %v567 = vpack.c.b16 %v450, %v447
  %v568 = vpack.c.b16 %v454, %v451
  %v569 = vpack.c.b16 %v455, %v452
  %v570 = vpack.c.b16 %v456, %v453
  %v571 = vpack.c.b16 %v460, %v457
  %v572 = vpack.c.b16 %v461, %v458
  %v573 = vpack.c.b16 %v462, %v459
  %v574 = vpack.c.b16 %v466, %v463
  %v575 = vpack.c.b16 %v467, %v464
  %v576 = vpack.c.b16 %v468, %v465
  %v577 = vpack.c.b16 %v472, %v469
  %v578 = vpack.c.b16 %v473, %v470
  %v579 = vpack.c.b16 %v474, %v471
  %v580 = vpack.c.b16 %v478, %v475
  %v581 = vpack.c.b16 %v479, %v476
  %v582 = vpack.c.b16 %v480, %v477
  %v583 = vpack.c.b16 %v484, %v481
  %v584 = vpack.c.b16 %v485, %v482
  %v585 = vpack.c.b16 %v486, %v483
  %v586 = vpack.c.b16 %v490, %v487
  %v587 = vpack.c.b16 %v491, %v488
  %v588 = vpack.c.b16 %v492, %v489
  %v589 = vpack.c.b16 %v496, %v493
  %v590 = vpack.c.b16 %v497, %v494
  %v591 = vpack.c.b16 %v498, %v495
  %v592 = vpack.c.b16 %v502, %v499
  %v593 = vpack.c.b16 %v503, %v500
  %v594 = vpack.c.b16 %v504, %v501
  %v595 = vpack.c.b16 %v508, %v505
  %v596 = vpack.c.b16 %v509, %v506
  %v597 = vpack.c.b16 %v510, %v507
  %v598 = vpack.c.b16 %v514, %v511
  %v599 = vpack.c.b16 %v515, %v512
  %v600 = vpack.c.b16 %v516, %v513
  %v601 = vpack.c.b16 %v520, %v517
  %v602 = vpack.c.b16 %v521, %v518
  %v603 = vpack.c.b16 %v522, %v519
  %v604 = vpack.c.b16 %v526, %v523
  %v605 = vpack.c.b16 %v527, %v524
  %v606 = vpack.c.b16 %v528, %v525
  %v607 = vpack.c.b16 %v532, %v529
  %v608 = vpack.c.b16 %v533, %v530
  %v609 = vpack.c.b16 %v534, %v531
  %v610 = vpack.c.b16 %v538, %v535
  %v611 = vpack.c.b16 %v539, %v536
  %v612 = vpack.c.b16 %v540, %v537
  %685 = vmatprep.subr.bf16.mxu0 %v542
  %686 = vmatpush1.bf16.msra.mxu0 %v541
  %687 = vmatprep.subr.bf16.mxu0 %v545
  %688 = vmatpush1.bf16.msra.mxu0 %v544
  %689 = vmatprep.subr.bf16.mxu0 %v548
  %690 = vmatpush1.bf16.msra.mxu0 %v547
  %691 = vmatprep.subr.bf16.mxu0 %v551
  %692 = vmatpush1.bf16.msra.mxu0 %v550
  %693 = vmatprep.subr.bf16.mxu0 %v554
  %694 = vmatpush1.bf16.msra.mxu0 %v553
  %695 = vmatprep.subr.bf16.mxu0 %v557
  %696 = vmatpush1.bf16.msra.mxu0 %v556
  %697 = vmatprep.subr.bf16.mxu0 %v560
  %698 = vmatpush1.bf16.msra.mxu0 %v559
  %699 = vmatprep.subr.bf16.mxu0 %v563
  %700 = vmatpush1.bf16.msra.mxu0 %v562
  %701 = vmatprep.subr.bf16.mxu0 %v566
  %702 = vmatpush1.bf16.msra.mxu0 %v565
  %703 = vmatprep.subr.bf16.mxu0 %v569
  %704 = vmatpush1.bf16.msra.mxu0 %v568
  %705 = vmatprep.subr.bf16.mxu0 %v572
  %706 = vmatpush1.bf16.msra.mxu0 %v571
  %707 = vmatprep.subr.bf16.mxu0 %v575
  %708 = vmatpush1.bf16.msra.mxu0 %v574
  %709 = vmatprep.subr.bf16.mxu0 %v578
  %710 = vmatpush1.bf16.msra.mxu0 %v577
  %711 = vmatprep.subr.bf16.mxu0 %v581
  %712 = vmatpush1.bf16.msra.mxu0 %v580
  %713 = vmatprep.subr.bf16.mxu0 %v584
  %714 = vmatpush1.bf16.msra.mxu0 %v583
  %715 = vmatprep.subr.bf16.mxu0 %v587
  %716 = vmatpush1.bf16.msra.mxu0 %v586
  %717 = vmatprep.mubr.bf16.mxu0 %v186
  %718 = vmatmul.mubr.bf16.gmra.mrb[0].mxu0 %v185
  %v719 = vpop.f32.mrb[0].mxu0
  %v720 = vadd.f32 %v289, %v719
  %v721 = vpop.f32.mrb[0].mxu0
  %v722 = vadd.f32 %v293, %v721
  %v723 = vpop.f32.mrb[0].mxu0
  %v724 = vadd.f32 %v289, %v723
  %v725 = vpop.f32.mrb[0].mxu0
  %v726 = vadd.f32 %v293, %v725
  %727 = vdwg.mxu0
  %728 = vmatprep.subr.bf16.mxu0 %v590
  %729 = vmatpush1.bf16.msra.mxu0 %v589
  %730 = vmatprep.subr.bf16.mxu0 %v593
  %731 = vmatpush1.bf16.msra.mxu0 %v592
  %732 = vmatprep.subr.bf16.mxu0 %v596
  %733 = vmatpush1.bf16.msra.mxu0 %v595
  %734 = vmatprep.subr.bf16.mxu0 %v599
  %735 = vmatpush1.bf16.msra.mxu0 %v598
  %736 = vmatprep.subr.bf16.mxu0 %v602
  %737 = vmatpush1.bf16.msra.mxu0 %v601
  %738 = vmatprep.subr.bf16.mxu0 %v605
  %739 = vmatpush1.bf16.msra.mxu0 %v604
  %740 = vmatprep.subr.bf16.mxu0 %v608
  %741 = vmatpush1.bf16.msra.mxu0 %v607
  %742 = vmatprep.subr.bf16.mxu0 %v611
  %743 = vmatpush1.bf16.msra.mxu0 %v610
  %744 = vmatprep.subr.bf16.mxu0 0
  %745 = vmatpush1.bf16.msra.mxu0 0
  %746 = vmatprep.subr.bf16.mxu0 0
  %747 = vmatpush1.bf16.msra.mxu0 0
  %748 = vmatprep.subr.bf16.mxu0 0
  %749 = vmatpush1.bf16.msra.mxu0 0
  %750 = vmatprep.subr.bf16.mxu0 0
  %751 = vmatpush1.bf16.msra.mxu0 0
  %752 = vmatprep.subr.bf16.mxu0 0
  %753 = vmatpush1.bf16.msra.mxu0 0
  %754 = vmatprep.subr.bf16.mxu0 0
  %755 = vmatpush1.bf16.msra.mxu0 0
  %756 = vmatprep.subr.bf16.mxu0 0
  %757 = vmatpush1.bf16.msra.mxu0 0
  %758 = vmatprep.subr.bf16.mxu0 0
  %759 = vmatpush1.bf16.msra.mxu0 0
  %760 = vmatprep.mubr.bf16.mxu0 0
  %761 = vmatmul.mubr.bf16.gmra.mrb[0].mxu0 %v187
  %v762 = vpop.f32.mrb[0].mxu0
  %v763 = vadd.f32 %v720, %v762
  %v764 = vpop.f32.mrb[0].mxu0
  %v765 = vadd.f32 %v722, %v764
  %v766 = vpop.f32.mrb[0].mxu0
  %v767 = vadd.f32 %v724, %v766
  %v768 = vpop.f32.mrb[0].mxu0
  %v769 = vadd.f32 %v726, %v768
  %770 = vdwg.mxu0
  %771 = vmatprep.subr.bf16.mxu0 0
  %772 = vmatpush1.bf16.msra.mxu0 %v543
  %773 = vmatprep.subr.bf16.mxu0 0
  %774 = vmatpush1.bf16.msra.mxu0 %v546
  %775 = vmatprep.subr.bf16.mxu0 0
  %776 = vmatpush1.bf16.msra.mxu0 %v549
  %777 = vmatprep.subr.bf16.mxu0 0
  %778 = vmatpush1.bf16.msra.mxu0 %v552
  %779 = vmatprep.subr.bf16.mxu0 0
  %780 = vmatpush1.bf16.msra.mxu0 %v555
  %781 = vmatprep.subr.bf16.mxu0 0
  %782 = vmatpush1.bf16.msra.mxu0 %v558
  %783 = vmatprep.subr.bf16.mxu0 0
  %784 = vmatpush1.bf16.msra.mxu0 %v561
  %785 = vmatprep.subr.bf16.mxu0 0
  %786 = vmatpush1.bf16.msra.mxu0 %v564
  %787 = vmatprep.subr.bf16.mxu0 0
  %788 = vmatpush1.bf16.msra.mxu0 %v567
  %789 = vmatprep.subr.bf16.mxu0 0
  %790 = vmatpush1.bf16.msra.mxu0 %v570
  %791 = vmatprep.subr.bf16.mxu0 0
  %792 = vmatpush1.bf16.msra.mxu0 %v573
  %793 = vmatprep.subr.bf16.mxu0 0
  %794 = vmatpush1.bf16.msra.mxu0 %v576
  %795 = vmatprep.subr.bf16.mxu0 0
  %796 = vmatpush1.bf16.msra.mxu0 %v579
  %797 = vmatprep.subr.bf16.mxu0 0
  %798 = vmatpush1.bf16.msra.mxu0 %v582
  %799 = vmatprep.subr.bf16.mxu0 0
  %800 = vmatpush1.bf16.msra.mxu0 %v585
  %801 = vmatprep.subr.bf16.mxu0 0
  %802 = vmatpush1.bf16.msra.mxu0 %v588
  %803 = vmatprep.mubr.bf16.mxu0 %v186
  %804 = vmatmul.mubr.bf16.gmra.mrb[0].mxu0 %v185
  %v805 = vpop.f32.mrb[0].mxu0
  %v806 = vadd.f32 %v297, %v805
  %v807 = vpop.f32.mrb[0].mxu0
  %v808 = vpop.f32.mrb[0].mxu0
  %v809 = vadd.f32 %v297, %v808
  %v810 = vpop.f32.mrb[0].mxu0
  %811 = vdwg.mxu0
  %812 = vmatprep.subr.bf16.mxu0 0
  %813 = vmatpush1.bf16.msra.mxu0 %v591
  %814 = vmatprep.subr.bf16.mxu0 0
  %815 = vmatpush1.bf16.msra.mxu0 %v594
  %816 = vmatprep.subr.bf16.mxu0 0
  %817 = vmatpush1.bf16.msra.mxu0 %v597
  %818 = vmatprep.subr.bf16.mxu0 0
  %819 = vmatpush1.bf16.msra.mxu0 %v600
  %820 = vmatprep.subr.bf16.mxu0 0
  %821 = vmatpush1.bf16.msra.mxu0 %v603
  %822 = vmatprep.subr.bf16.mxu0 0
  %823 = vmatpush1.bf16.msra.mxu0 %v606
  %824 = vmatprep.subr.bf16.mxu0 0
  %825 = vmatpush1.bf16.msra.mxu0 %v609
  %826 = vmatprep.subr.bf16.mxu0 0
  %827 = vmatpush1.bf16.msra.mxu0 %v612
  %828 = vmatprep.subr.bf16.mxu0 0
  %829 = vmatpush1.bf16.msra.mxu0 0
  %830 = vmatprep.subr.bf16.mxu0 0
  %831 = vmatpush1.bf16.msra.mxu0 0
  %832 = vmatprep.subr.bf16.mxu0 0
  %833 = vmatpush1.bf16.msra.mxu0 0
  %834 = vmatprep.subr.bf16.mxu0 0
  %835 = vmatpush1.bf16.msra.mxu0 0
  %836 = vmatprep.subr.bf16.mxu0 0
  %837 = vmatpush1.bf16.msra.mxu0 0
  %838 = vmatprep.subr.bf16.mxu0 0
  %839 = vmatpush1.bf16.msra.mxu0 0
  %840 = vmatprep.subr.bf16.mxu0 0
  %841 = vmatpush1.bf16.msra.mxu0 0
  %842 = vmatprep.subr.bf16.mxu0 0
  %843 = vmatpush1.bf16.msra.mxu0 0
  %844 = vmatprep.mubr.bf16.mxu0 0
  %845 = vmatmul.mubr.bf16.gmra.mrb[0].mxu0 %v187
  %v846 = vpop.f32.mrb[0].mxu0
  %v847 = vadd.f32 %v806, %v846
  %v848 = vpop.f32.mrb[0].mxu0
  %v849 = vpop.f32.mrb[0].mxu0
  %v850 = vadd.f32 %v809, %v849
  %v851 = vpop.f32.mrb[0].mxu0
  %852 = vdwg.mxu0
  %v853 = vmax.f32 %v763, 0.0
  %v854 = vmax.f32 %v765, 0.0
  %v855 = vmax.f32 %v847, 0.0
  %v856 = vmax.f32 %v767, 0.0
  %v857 = vmax.f32 %v769, 0.0
  %v858 = vmax.f32 %v850, 0.0
  %v859 = vpack.c.bf16 %v856, %v853
  %v860 = vpack.c.bf16 %v857, %v854
  %v861 = vpack.c.bf16 %v858, %v855
  %v862 = vld [vmem:[%s5] sm:$0xf]
  %v863 = vld [vmem:[%s5 + $0x4] sm:$0xf]
  %v864 = vld [vmem:[%s5 + $0x8] sm:$0xf]
  %v865 = vld [vmem:[%s5 + $0xc] sm:$0xf]
  %v866 = vld [vmem:[%s5 + $0x10] sm:$0xf]
  %v867 = vld [vmem:[%s5 + $0x14] sm:$0xf]
  %v868 = vld [vmem:[%s5 + $0x18] sm:$0xf]
  %v869 = vld [vmem:[%s5 + $0x1c] sm:$0xf]
  %v870 = vld [vmem:[%s5 + $0x20] sm:$0xf]
  %v871 = vld [vmem:[%s5 + $0x24] sm:$0xf]
  %v872 = vld [vmem:[%s5 + $0x28] sm:$0xf]
  %v873 = vld [vmem:[%s5 + $0x2c] sm:$0xf]
  %v874 = vld [vmem:[%s5 + $0x30] sm:$0xf]
  %v875 = vld [vmem:[%s5 + $0x34] sm:$0xf]
  %v876 = vld [vmem:[%s5 + $0x38] sm:$0xf]
  %v877 = vld [vmem:[%s5 + $0x3c] sm:$0xf]
  %v878 = vld [vmem:[%s5 + $0x40] sm:$0xf]
  %v879 = vld [vmem:[%s5 + $0x44] sm:$0xf]
  %v880 = vld [vmem:[%s5 + $0x48] sm:$0xf]
  %v881 = vld [vmem:[%s5 + $0x4c] sm:$0xf]
  %v882 = vld [vmem:[%s5 + $0x50] sm:$0xf]
  %v883 = vld [vmem:[%s5 + $0x54] sm:$0xf]
  %v884 = vld [vmem:[%s5 + $0x58] sm:$0xf]
  %v885 = vld [vmem:[%s5 + $0x5c] sm:$0xf]
  %v886 = vld [vmem:[%s5 + $0x60] sm:$0xf]
  %v887 = vld [vmem:[%s5 + $0x64] sm:$0xf]
  %v888 = vld [vmem:[%s5 + $0x68] sm:$0xf]
  %v889 = vld [vmem:[%s5 + $0x6c] sm:$0xf]
  %v890 = vld [vmem:[%s5 + $0x70] sm:$0xf]
  %v891 = vld [vmem:[%s5 + $0x74] sm:$0xf]
  %v892 = vld [vmem:[%s5 + $0x78] sm:$0xf]
  %v893 = vld [vmem:[%s5 + $0x7c] sm:$0xf]
  %v894 = vld [vmem:[%s5 + $0x80] sm:$0xf]
  %v895 = vld [vmem:[%s5 + $0x84] sm:$0xf]
  %v896 = vld [vmem:[%s5 + $0x88] sm:$0xf]
  %v897 = vld [vmem:[%s5 + $0x8c] sm:$0xf]
  %v898 = vld [vmem:[%s5 + $0x90] sm:$0xf]
  %v899 = vld [vmem:[%s5 + $0x94] sm:$0xf]
  %v900 = vld [vmem:[%s5 + $0x98] sm:$0xf]
  %v901 = vld [vmem:[%s5 + $0x9c] sm:$0xf]
  %v902 = vld [vmem:[%s5 + $0xa0] sm:$0xf]
  %v903 = vld [vmem:[%s5 + $0xa4] sm:$0xf]
  %v904 = vld [vmem:[%s5 + $0xa8] sm:$0xf]
  %v905 = vld [vmem:[%s5 + $0xac] sm:$0xf]
  %v906 = vld [vmem:[%s5 + $0xb0] sm:$0xf]
  %v907 = vld [vmem:[%s5 + $0xb4] sm:$0xf]
  %v908 = vld [vmem:[%s5 + $0xb8] sm:$0xf]
  %v909 = vld [vmem:[%s5 + $0xbc] sm:$0xf]
  %v910 = vld [vmem:[%s6] sm:$0x1]
  %v912 = vlaneseq
  %v913 = vshrl.u32 %v912, 7
  %v914 = vsub.s32 0, %v913
  %v915 = vrot.slane %v910, %v914
  %v965 = vunpack.c.l.b16 %v862
  %v966 = vunpack.c.l.b16 %v863
  %v967 = vunpack.c.l.b16 %v864
  %v968 = vunpack.c.l.b16 %v865
  %v969 = vunpack.c.l.b16 %v866
  %v970 = vunpack.c.l.b16 %v867
  %v971 = vunpack.c.l.b16 %v868
  %v972 = vunpack.c.l.b16 %v869
  %v973 = vunpack.c.l.b16 %v870
  %v974 = vunpack.c.l.b16 %v871
  %v975 = vunpack.c.l.b16 %v872
  %v976 = vunpack.c.l.b16 %v873
  %v977 = vunpack.c.l.b16 %v874
  %v978 = vunpack.c.l.b16 %v875
  %v979 = vunpack.c.l.b16 %v876
  %v980 = vunpack.c.l.b16 %v877
  %v981 = vunpack.c.l.b16 %v878
  %v982 = vunpack.c.l.b16 %v879
  %v983 = vunpack.c.l.b16 %v880
  %v984 = vunpack.c.l.b16 %v881
  %v985 = vunpack.c.l.b16 %v882
  %v986 = vunpack.c.l.b16 %v883
  %v987 = vunpack.c.l.b16 %v884
  %v988 = vunpack.c.l.b16 %v885
  %v989 = vunpack.c.l.b16 %v886
  %v990 = vunpack.c.l.b16 %v887
  %v991 = vunpack.c.l.b16 %v888
  %v992 = vunpack.c.l.b16 %v889
  %v993 = vunpack.c.l.b16 %v890
  %v994 = vunpack.c.l.b16 %v891
  %v995 = vunpack.c.l.b16 %v892
  %v996 = vunpack.c.l.b16 %v893
  %v997 = vunpack.c.l.b16 %v894
  %v998 = vunpack.c.l.b16 %v895
  %v999 = vunpack.c.l.b16 %v896
  %v1000 = vunpack.c.l.b16 %v897
  %v1001 = vunpack.c.l.b16 %v898
  %v1002 = vunpack.c.l.b16 %v899
  %v1003 = vunpack.c.l.b16 %v900
  %v1004 = vunpack.c.l.b16 %v901
  %v1005 = vunpack.c.l.b16 %v902
  %v1006 = vunpack.c.l.b16 %v903
  %v1007 = vunpack.c.l.b16 %v904
  %v1008 = vunpack.c.l.b16 %v905
  %v1009 = vunpack.c.l.b16 %v906
  %v1010 = vunpack.c.l.b16 %v907
  %v1011 = vunpack.c.l.b16 %v908
  %v1012 = vunpack.c.l.b16 %v909
  %v1013 = vpack.c.b16 %v966, %v965
  %v1014 = vpack.c.b16 %v968, %v967
  %v1015 = vpack.c.b16 %v970, %v969
  %v1016 = vpack.c.b16 %v972, %v971
  %v1017 = vpack.c.b16 %v974, %v973
  %v1018 = vpack.c.b16 %v976, %v975
  %v1019 = vpack.c.b16 %v978, %v977
  %v1020 = vpack.c.b16 %v980, %v979
  %v1021 = vpack.c.b16 %v982, %v981
  %v1022 = vpack.c.b16 %v984, %v983
  %v1023 = vpack.c.b16 %v986, %v985
  %v1024 = vpack.c.b16 %v988, %v987
  %v1025 = vpack.c.b16 %v990, %v989
  %v1026 = vpack.c.b16 %v992, %v991
  %v1027 = vpack.c.b16 %v994, %v993
  %v1028 = vpack.c.b16 %v996, %v995
  %v1029 = vpack.c.b16 %v998, %v997
  %v1030 = vpack.c.b16 %v1000, %v999
  %v1031 = vpack.c.b16 %v1002, %v1001
  %v1032 = vpack.c.b16 %v1004, %v1003
  %v1033 = vpack.c.b16 %v1006, %v1005
  %v1034 = vpack.c.b16 %v1008, %v1007
  %v1035 = vpack.c.b16 %v1010, %v1009
  %v1036 = vpack.c.b16 %v1012, %v1011
  %1061 = vmatprep.subr.bf16.mxu0 0
  %1062 = vmatpush1.bf16.msra.mxu0 %v1013
  %1063 = vmatprep.subr.bf16.mxu0 0
  %1064 = vmatpush1.bf16.msra.mxu0 %v1014
  %1065 = vmatprep.subr.bf16.mxu0 0
  %1066 = vmatpush1.bf16.msra.mxu0 %v1015
  %1067 = vmatprep.subr.bf16.mxu0 0
  %1068 = vmatpush1.bf16.msra.mxu0 %v1016
  %1069 = vmatprep.subr.bf16.mxu0 0
  %1070 = vmatpush1.bf16.msra.mxu0 %v1017
  %1071 = vmatprep.subr.bf16.mxu0 0
  %1072 = vmatpush1.bf16.msra.mxu0 %v1018
  %1073 = vmatprep.subr.bf16.mxu0 0
  %1074 = vmatpush1.bf16.msra.mxu0 %v1019
  %1075 = vmatprep.subr.bf16.mxu0 0
  %1076 = vmatpush1.bf16.msra.mxu0 %v1020
  %1077 = vmatprep.subr.bf16.mxu0 0
  %1078 = vmatpush1.bf16.msra.mxu0 %v1021
  %1079 = vmatprep.subr.bf16.mxu0 0
  %1080 = vmatpush1.bf16.msra.mxu0 %v1022
  %1081 = vmatprep.subr.bf16.mxu0 0
  %1082 = vmatpush1.bf16.msra.mxu0 %v1023
  %1083 = vmatprep.subr.bf16.mxu0 0
  %1084 = vmatpush1.bf16.msra.mxu0 %v1024
  %1085 = vmatprep.subr.bf16.mxu0 0
  %1086 = vmatpush1.bf16.msra.mxu0 %v1025
  %1087 = vmatprep.subr.bf16.mxu0 0
  %1088 = vmatpush1.bf16.msra.mxu0 %v1026
  %1089 = vmatprep.subr.bf16.mxu0 0
  %1090 = vmatpush1.bf16.msra.mxu0 %v1027
  %1091 = vmatprep.subr.bf16.mxu0 0
  %1092 = vmatpush1.bf16.msra.mxu0 %v1028
  %1093 = vmatprep.mubr.bf16.mxu0 %v860
  %1094 = vmatmul.mubr.bf16.gmra.mrb[0].mxu0 %v859
  %v1095 = vpop.f32.mrb[0].mxu0
  %v1096 = vadd.f32 %v915, %v1095
  %v1097 = vpop.f32.mrb[0].mxu0
  %v1098 = vpop.f32.mrb[0].mxu0
  %v1099 = vadd.f32 %v915, %v1098
  %v1100 = vpop.f32.mrb[0].mxu0
  %1101 = vdwg.mxu0
  %1102 = vmatprep.subr.bf16.mxu0 0
  %1103 = vmatpush1.bf16.msra.mxu0 %v1029
  %1104 = vmatprep.subr.bf16.mxu0 0
  %1105 = vmatpush1.bf16.msra.mxu0 %v1030
  %1106 = vmatprep.subr.bf16.mxu0 0
  %1107 = vmatpush1.bf16.msra.mxu0 %v1031
  %1108 = vmatprep.subr.bf16.mxu0 0
  %1109 = vmatpush1.bf16.msra.mxu0 %v1032
  %1110 = vmatprep.subr.bf16.mxu0 0
  %1111 = vmatpush1.bf16.msra.mxu0 %v1033
  %1112 = vmatprep.subr.bf16.mxu0 0
  %1113 = vmatpush1.bf16.msra.mxu0 %v1034
  %1114 = vmatprep.subr.bf16.mxu0 0
  %1115 = vmatpush1.bf16.msra.mxu0 %v1035
  %1116 = vmatprep.subr.bf16.mxu0 0
  %1117 = vmatpush1.bf16.msra.mxu0 %v1036
  %1118 = vmatprep.subr.bf16.mxu0 0
  %1119 = vmatpush1.bf16.msra.mxu0 0
  %1120 = vmatprep.subr.bf16.mxu0 0
  %1121 = vmatpush1.bf16.msra.mxu0 0
  %1122 = vmatprep.subr.bf16.mxu0 0
  %1123 = vmatpush1.bf16.msra.mxu0 0
  %1124 = vmatprep.subr.bf16.mxu0 0
  %1125 = vmatpush1.bf16.msra.mxu0 0
  %1126 = vmatprep.subr.bf16.mxu0 0
  %1127 = vmatpush1.bf16.msra.mxu0 0
  %1128 = vmatprep.subr.bf16.mxu0 0
  %1129 = vmatpush1.bf16.msra.mxu0 0
  %1130 = vmatprep.subr.bf16.mxu0 0
  %1131 = vmatpush1.bf16.msra.mxu0 0
  %1132 = vmatprep.subr.bf16.mxu0 0
  %1133 = vmatpush1.bf16.msra.mxu0 0
  %1134 = vmatprep.mubr.bf16.mxu0 0
  %1135 = vmatmul.mubr.bf16.gmra.mrb[0].mxu0 %v861
  %v1136 = vpop.f32.mrb[0].mxu0
  %v1137 = vadd.f32 %v1096, %v1136
  %v1138 = vpop.f32.mrb[0].mxu0
  %v1139 = vpop.f32.mrb[0].mxu0
  %v1140 = vadd.f32 %v1099, %v1139
  %v1141 = vpop.f32.mrb[0].mxu0
  %1142 = vdwg.mxu0
  %v1143 = vsub.f32 0.0, %v1137
  %v1144 = vsub.f32 0.0, %v1140
  %v1145 = vmul.f32 %v1143, 1.442695
  %v1146 = vpow.pop %v1145
  %v1147 = vmul.f32 %v1144, 1.442695
  %v1148 = vpow.pop %v1147
  %v1149 = vadd.f32 %v1146, 1.0
  %v1150 = vadd.f32 %v1148, 1.0
  %v1151 = vrcp.pop %v1149
  %v1152 = vrcp.pop %v1150
  %1153 = vst [vmem:[%s7] sm:$0xff] %v1151
  %1154 = vst [vmem:[%s7 + $0x8] sm:$0xff] %v1152
  // Predicated region
  $region30: #{discriminator_forward.1} parent=0 // pred_check
    _
  $region31: #{discriminator_forward.1} parent=0 // pred_check_branch
    %1156 = sbr.rel (0) target = $region33
  $region32: #{discriminator_forward.1} parent=0 // pred_region
    _
  $region33: #{discriminator_forward.1} parent=0 // pred_fallthru
    _
  // Predicated region
  $region34: #{discriminator_forward.1} parent=0 // pred_check
    _
  $region35: #{discriminator_forward.1} parent=0 // pred_check_branch
    %1158 = sbr.rel (0) target = $region37
  $region36: #{discriminator_forward.1} parent=0 // pred_region
    _
  $region37: #{discriminator_forward.1} parent=0 // pred_fallthru
    _

</llo_original>
